<compile_context>
chip_gen: v7x
topology: tpu7x:2x2x1
jax: 0.10.0
libtpu: 0.0.40
codegen_flags: <defaults>
</compile_context>

<pallas_src>
import functools
import math

import jax
import jax.numpy as jnp
import numpy as np
from jax.experimental import pallas as pl
from jax.experimental.pallas import tpu as pltpu


def _equal_linear_kernel(x_ref, wT_ref, b_ref, o_ref, acc_ref, *,
                         w_scale, b_scale, activation, negative_slope, act_scale):
    k = pl.program_id(2)

    @pl.when(k == 0)
    def _():
        acc_ref[...] = jnp.zeros_like(acc_ref)

    # MXU matmul; equalized-lr weight scaling folded in (free VPU filler).
    acc_ref[...] += jnp.dot(x_ref[...], wT_ref[...] * w_scale,
                            preferred_element_type=jnp.float32)

    @pl.when(k == pl.num_programs(2) - 1)
    def _():
        y = acc_ref[...] + b_ref[...] * b_scale   # (tm,tn) + (1,tn) broadcast
        if activation:
            y = jnp.where(y >= 0, y, y * negative_slope) * act_scale
        o_ref[...] = y.astype(o_ref.dtype)


def _round_up(v, m):
    return ((v + m - 1) // m) * m


def equal_linear(x, weight, bias=None, *, lr_mul=1.0, activation=None,
                 negative_slope=0.2, act_scale=2 ** 0.5,
                 tm_max=256, tn_max=256, tk_max=512):
    """x: (..., in_dim), weight: (out_dim, in_dim), bias: (out_dim,) or None."""
    out_dim, in_dim = weight.shape
    orig_lead = x.shape[:-1]
    x2 = x.reshape(-1, in_dim)
    M, K = x2.shape
    N = out_dim

    w_scale = (1.0 / math.sqrt(in_dim)) * float(lr_mul)
    if bias is None:
        bias = jnp.zeros((out_dim,), dtype=x2.dtype)
        b_scale = 0.0
    else:
        b_scale = float(lr_mul)

    # (8,128)-aligned, lane-dense tiling; biggest tile that fits the
    # double-buffered VMEM budget on every generation.
    tm = min(tm_max, _round_up(M, 8))
    tn = min(tn_max, _round_up(N, 128))
    tk = min(tk_max, _round_up(K, 128))
    Mp, Np, Kp = _round_up(M, tm), _round_up(N, tn), _round_up(K, tk)

    x_p = jnp.pad(x2, ((0, Mp - M), (0, Kp - K)))
    wT_p = jnp.pad(weight.T, ((0, Kp - K), (0, Np - N)))          # (K, N): N in lanes
    b_p = jnp.pad(bias.astype(x2.dtype), (0, Np - N)).reshape(1, Np)

    kernel = functools.partial(
        _equal_linear_kernel,
        w_scale=w_scale, b_scale=b_scale,
        activation=bool(activation),
        negative_slope=float(negative_slope), act_scale=float(act_scale))

    out_p = pl.pallas_call(
        kernel,
        out_shape=jax.ShapeDtypeStruct((Mp, Np), x2.dtype),
        grid_spec=pltpu.PrefetchScalarGridSpec(
            num_scalar_prefetch=0,
            grid=(Mp // tm, Np // tn, Kp // tk),
            in_specs=[
                pl.BlockSpec((tm, tk), lambda i, j, k: (i, k)),   # activations
                pl.BlockSpec((tk, tn), lambda i, j, k: (k, j)),   # weight^T
                pl.BlockSpec((1, tn), lambda i, j, k: (0, j)),    # bias (VMEM row)
            ],
            out_specs=pl.BlockSpec((tm, tn), lambda i, j, k: (i, j)),
            scratch_shapes=[pltpu.VMEM((tm, tn), jnp.float32)],
        ),
        compiler_params=pltpu.CompilerParams(
            dimension_semantics=("parallel", "parallel", "arbitrary")),
    )(x_p, wT_p, b_p)

    return out_p[:M, :N].reshape(*orig_lead, N)


class EqualLinear:
    """JAX mirror of the PyTorch EqualLinear module (forward only)."""

    def __init__(self, in_dim, out_dim, bias=True, bias_init=0.0, lr_mul=1.0,
                 activation=None, key=None):
        if key is None:
            key = jax.random.PRNGKey(0)
        # nn.Parameter(torch.randn(out_dim, in_dim).div_(lr_mul))
        self.weight = jax.random.normal(key, (out_dim, in_dim),
                                        dtype=jnp.float32) / lr_mul
        self.bias = (jnp.full((out_dim,), float(bias_init), dtype=jnp.float32)
                     if bias else None)
        self.activation = activation
        self.lr_mul = lr_mul
        self.scale = 1.0 / math.sqrt(in_dim) * lr_mul

    def __call__(self, x):
        return equal_linear(x, self.weight, self.bias,
                            lr_mul=self.lr_mul, activation=self.activation)


def _reference(x, weight, bias, lr_mul, activation):
    scale = 1.0 / math.sqrt(weight.shape[1]) * lr_mul
    out = x @ (weight * scale).T
    if bias is not None:
        out = out + (bias * lr_mul).reshape(1, -1)
    if activation:
        out = jnp.where(out >= 0, out, out * 0.2) * (2 ** 0.5)
    return out


if __name__ == "__main__":
    key = jax.random.PRNGKey(0)
    kx, kw1, kw2 = jax.random.split(key, 3)

    batch, in_dim, out_dim = 8, 32, 48
    x = jax.random.normal(kx, (batch, in_dim), dtype=jnp.float32)

    # Path 1: plain linear (bias added in the matmul epilogue).
    lin = EqualLinear(in_dim, out_dim, bias=True, bias_init=0.2, lr_mul=0.5,
                      activation=None, key=kw1)
    out1 = jax.block_until_ready(lin(x))
    ref1 = _reference(x, lin.weight, lin.bias, lin.lr_mul, None)
    np.testing.assert_allclose(np.asarray(out1), np.asarray(ref1),
                               rtol=1e-5, atol=1e-5)

    # Path 2: fused leaky-relu activation epilogue.
    lin2 = EqualLinear(in_dim, out_dim, bias=True, bias_init=0.1, lr_mul=1.0,
                       activation="fused_lrelu", key=kw2)
    out2 = jax.block_until_ready(lin2(x))
    ref2 = _reference(x, lin2.weight, lin2.bias, lin2.lr_mul, "fused_lrelu")
    np.testing.assert_allclose(np.asarray(out2), np.asarray(ref2),
                               rtol=1e-5, atol=1e-5)

    print("KERNEL_OK")
</pallas_src>

<mosaic_0001>
module attributes {stable_mosaic.version = 11 : i64} {
  func.func @_equal_linear_kernel(%arg0: i32, %arg1: i32, %arg2: i32, %arg3: memref<8x128xf32, #tpu.memory_space<vmem>>, %arg4: memref<128x128xf32, #tpu.memory_space<vmem>>, %arg5: memref<1x128xf32, #tpu.memory_space<vmem>>, %arg6: memref<8x128xf32, #tpu.memory_space<vmem>>, %arg7: memref<8x128xf32, #tpu.memory_space<vmem>>) attributes {dimension_semantics = [#tpu.dimension_semantics<parallel>, #tpu.dimension_semantics<parallel>, #tpu.dimension_semantics<arbitrary>], iteration_bounds = array<i64: 1, 1, 1>, scalar_prefetch = 0 : i64, scratch_operands = 1 : i64, tpu.core_type = #tpu.core_type<tc>, window_params = [{transform_indices = @transform_0, window_bounds = array<i64: 8, 128>}, {transform_indices = @transform_1, window_bounds = array<i64: 128, 128>}, {transform_indices = @transform_2, window_bounds = array<i64: 1, 128>}, {transform_indices = @transform_3, window_bounds = array<i64: 8, 128>}]} {
    %c0_i32 = arith.constant 0 : i32
    %0 = arith.cmpi eq, %arg2, %c0_i32 : i32
    %1 = arith.extui %0 : i1 to i32
    %c0_i32_0 = arith.constant 0 : i32
    %2 = arith.cmpi ne, %1, %c0_i32_0 : i32
    scf.if %2 {
      %cst_11 = arith.constant 0.000000e+00 : f32
      %14 = vector.broadcast %cst_11 : f32 to vector<8x128xf32>
      %c0_12 = arith.constant 0 : index
      %c0_13 = arith.constant 0 : index
      %15 = vector.load %arg7[%c0_12, %c0_13] : memref<8x128xf32, #tpu.memory_space<vmem>>, vector<8x128xf32>
      tpu.vector_store %arg7[%c0_12, %c0_13], %14 {strides = array<i32>} : memref<8x128xf32, #tpu.memory_space<vmem>>, vector<8x128xf32>,
    } else {
    }
    %c0 = arith.constant 0 : index
    %c0_1 = arith.constant 0 : index
    %3 = vector.load %arg7[%c0, %c0_1] : memref<8x128xf32, #tpu.memory_space<vmem>>, vector<8x128xf32>
    %c0_2 = arith.constant 0 : index
    %c0_3 = arith.constant 0 : index
    %4 = vector.load %arg3[%c0_2, %c0_3] : memref<8x128xf32, #tpu.memory_space<vmem>>, vector<8x128xf32>
    %c0_4 = arith.constant 0 : index
    %c0_5 = arith.constant 0 : index
    %5 = vector.load %arg4[%c0_4, %c0_5] : memref<128x128xf32, #tpu.memory_space<vmem>>, vector<128x128xf32>
    %cst = arith.constant 0.0883883461 : f32
    %6 = vector.broadcast %cst : f32 to vector<128x128xf32>
    %7 = arith.mulf %5, %6 : vector<128x128xf32>
    %cst_6 = arith.constant dense<0.000000e+00> : vector<8x128xf32>
    %8 = tpu.matmul %4, %7, %cst_6 {dimension_numbers = #tpu.dot_dimension_numbers<[1], [0], [0], [1], [0, 0, 1, 1], [], []>} : vector<8x128xf32>, vector<128x128xf32>, vector<8x128xf32> -> vector<8x128xf32>
    %9 = arith.addf %3, %8 : vector<8x128xf32>
    %c0_7 = arith.constant 0 : index
    %c0_8 = arith.constant 0 : index
    %10 = vector.load %arg7[%c0_7, %c0_8] : memref<8x128xf32, #tpu.memory_space<vmem>>, vector<8x128xf32>
    tpu.vector_store %arg7[%c0_7, %c0_8], %9 {strides = array<i32>} : memref<8x128xf32, #tpu.memory_space<vmem>>, vector<8x128xf32>,
    %c0_i32_9 = arith.constant 0 : i32
    %11 = arith.cmpi eq, %arg2, %c0_i32_9 : i32
    %12 = arith.extui %11 : i1 to i32
    %c0_i32_10 = arith.constant 0 : i32
    %13 = arith.cmpi ne, %12, %c0_i32_10 : i32
    scf.if %13 {
      %c0_11 = arith.constant 0 : index
      %c0_12 = arith.constant 0 : index
      %14 = vector.load %arg7[%c0_11, %c0_12] : memref<8x128xf32, #tpu.memory_space<vmem>>, vector<8x128xf32>
      %c0_13 = arith.constant 0 : index
      %c0_14 = arith.constant 0 : index
      %15 = vector.load %arg5[%c0_13, %c0_14] : memref<1x128xf32, #tpu.memory_space<vmem>>, vector<1x128xf32>
      %cst_15 = arith.constant 5.000000e-01 : f32
      %16 = vector.broadcast %cst_15 : f32 to vector<1x128xf32>
      %17 = arith.mulf %15, %16 : vector<1x128xf32>
      %18 = vector.broadcast %17 : vector<1x128xf32> to vector<8x128xf32>
      %19 = arith.addf %14, %18 : vector<8x128xf32>
      %c0_16 = arith.constant 0 : index
      %c0_17 = arith.constant 0 : index
      %20 = vector.load %arg6[%c0_16, %c0_17] : memref<8x128xf32, #tpu.memory_space<vmem>>, vector<8x128xf32>
      tpu.vector_store %arg6[%c0_16, %c0_17], %19 {strides = array<i32>} : memref<8x128xf32, #tpu.memory_space<vmem>>, vector<8x128xf32>,
    } else {
    }
    return
  }
  func.func @transform_0(%arg0: i32, %arg1: i32, %arg2: i32) -> (i32, i32) {
    %c0_i32 = arith.constant 0 : i32
    return %arg0, %arg2 : i32, i32
  }
  func.func @transform_1(%arg0: i32, %arg1: i32, %arg2: i32) -> (i32, i32) {
    %c0_i32 = arith.constant 0 : i32
    return %arg2, %arg1 : i32, i32
  }
  func.func @transform_2(%arg0: i32, %arg1: i32, %arg2: i32) -> (i32, i32) {
    %c0_i32 = arith.constant 0 : i32
    %c0_i32_0 = arith.constant 0 : i32
    return %c0_i32, %arg1 : i32, i32
  }
  func.func @transform_3(%arg0: i32, %arg1: i32, %arg2: i32) -> (i32, i32) {
    %c0_i32 = arith.constant 0 : i32
    return %arg0, %arg1 : i32, i32
  }
}

</mosaic_0001>

<llo_original>
// kernel: tpu_custom_call.1
$region0: #{tpu_custom_call.1}
  #allocation0 [shape = 'u32[]', space=smem, size = 0x4, offset = 0x4, fixed_abs, tag = 'smem constant byte address 0x4 - core index']
  #allocation1 [shape = 'u32[144,128]{1,0:T(1,128)}', space=vmem, size = 0x12000, scoped, tag = 'internal scratch']
  #allocation2 [shape = 'f32[8,128]{1,0:T(8,128)}', space=vmem, size = 0x1000, scoped, tag = 'scratch operand']
  %s0 = inlined_call_operand.hbm [shape: f32[8,128], index: 0, kind: input, shape index: {}]
  %s1 = inlined_call_operand.hbm [shape: f32[128,128], index: 1, kind: input, shape index: {}]
  %s2 = inlined_call_operand.vmem [shape: f32[1,128], index: 2, kind: input, shape index: {}]
  %s3 = inlined_call_operand.hbm [shape: f32[8,128], index: 3, kind: output, shape index: {}]
  %s4 = sld [smem:[#allocation0]]
  $region38: #{tpu_custom_call.1} parent=0
    _
  %s6 = ssub.s32 1, %s4
  %s7 = scalar_select 0, %s6, %s4
  $region1: #{tpu_custom_call.1} parent=0
    #allocation3 [shape = 'u8[4096]{0}', space=vmem, size = 0x1000, scoped, tag = 'input window, operand 0, single buffered']
    #allocation4 [shape = 's32[1]{0}', space=sflag, size = 0x4, scoped, tag = 'scoped memory for tpu_custom_call.1']
    #allocation5 [shape = 's32[1]{0}', space=sflag, size = 0x4, scoped, tag = 'scoped memory for tpu_custom_call.1']
    #allocation6 [shape = 'u8[65536]{0}', space=vmem, size = 0x10000, scoped, tag = 'input window, operand 1, single buffered']
    #allocation7 [shape = 's32[1]{0}', space=sflag, size = 0x4, scoped, tag = 'scoped memory for tpu_custom_call.1']
    #allocation8 [shape = 'u8[4096]{0}', space=vmem, size = 0x1000, scoped, tag = 'output window, operand 0, single buffered']
    %8 = vsyncpa [#allocation4], 0
    %9 = vsyncpa [#allocation7], 0
    %10 = vsyncpa [#allocation5], 0
    // Predicated region
    $region2: #{tpu_custom_call.1} parent=1 // pred_check
      _
    $region3: #{tpu_custom_call.1} parent=1 // pred_check_branch
      %12 = sbr.rel (0) target = $region5
    $region4: #{tpu_custom_call.1} parent=1 // pred_region
      %s14 = ssub.s32 128, 128
      %15 = vsyncadd [#allocation4], %s14
      %s17 = sshll.u32 [#allocation3], 4
      %s18 = int_to_ptr.vmem [resolvable:$true] %s17
      %20 = dma.hbm_to_vmem [thread:$0]  %s0, 128, %s18, [#allocation4]
    $region5: #{tpu_custom_call.1} parent=1 // pred_fallthru
      _
    // Predicated region
    $region6: #{tpu_custom_call.1} parent=1 // pred_check
      _
    $region7: #{tpu_custom_call.1} parent=1 // pred_check_branch
      %22 = sbr.rel (0) target = $region9
    $region8: #{tpu_custom_call.1} parent=1 // pred_region
      %s24 = ssub.s32 2048, 2048
      %25 = vsyncadd [#allocation7], %s24
      %s26 = sshll.u32 [#allocation6], 4
      %s27 = int_to_ptr.vmem [resolvable:$true] %s26
      %32 = dma.hbm_to_vmem [thread:$0]  %s1, 2048, %s27, [#allocation7], 128, 128, 8
    $region9: #{tpu_custom_call.1} parent=1 // pred_fallthru
      _
    // Predicated region
    $region10: #{tpu_custom_call.1} parent=1 // pred_check
      _
    $region11: #{tpu_custom_call.1} parent=1 // pred_check_branch
      %34 = sbr.rel (0) target = $region13
    $region12: #{tpu_custom_call.1} parent=1 // pred_region
      _
    $region13: #{tpu_custom_call.1} parent=1 // pred_fallthru
      _
    // Predicated region
    $region14: #{tpu_custom_call.1} parent=1 // pred_check
      _
    $region15: #{tpu_custom_call.1} parent=1 // pred_check_branch
      %36 = sbr.rel (0) target = $region17
    $region16: #{tpu_custom_call.1} parent=1 // pred_region
      %37 = dma.done [#allocation4], 128
    $region17: #{tpu_custom_call.1} parent=1 // pred_fallthru
      _
    // Predicated region
    $region18: #{tpu_custom_call.1} parent=1 // pred_check
      _
    $region19: #{tpu_custom_call.1} parent=1 // pred_check_branch
      %39 = sbr.rel (0) target = $region21
    $region20: #{tpu_custom_call.1} parent=1 // pred_region
      %40 = dma.done [#allocation7], 2048
    $region21: #{tpu_custom_call.1} parent=1 // pred_fallthru
      _
    %p41 = scmp.eq.s32.totalorder 0, 0
    // Predicated region
    $region22: #{tpu_custom_call.1} parent=1 // pred_check
      %p42 = pneg %p41
    $region23: #{tpu_custom_call.1} parent=1 // pred_check_branch
      %44 = sbr.rel (%p42) target = $region25
    $region24: #{tpu_custom_call.1} parent=1 // pred_region
      %45 = vst [vmem:[#allocation2] sm:$0xff] 0.0
    $region25: #{tpu_custom_call.1} parent=1 // pred_fallthru
      _
    %v46 = vld [vmem:[#allocation2] sm:$0xff]
    %v47 = vld [vmem:[#allocation3] sm:$0xff]
    %v48 = vld [vmem:[#allocation6] sm:$0xff]
    %v49 = vld [vmem:[#allocation6 + $0x8] sm:$0xff]
    %v50 = vld [vmem:[#allocation6 + $0x10] sm:$0xff]
    %v51 = vld [vmem:[#allocation6 + $0x18] sm:$0xff]
    %v52 = vld [vmem:[#allocation6 + $0x20] sm:$0xff]
    %v53 = vld [vmem:[#allocation6 + $0x28] sm:$0xff]
    %v54 = vld [vmem:[#allocation6 + $0x30] sm:$0xff]
    %v55 = vld [vmem:[#allocation6 + $0x38] sm:$0xff]
    %v56 = vld [vmem:[#allocation6 + $0x40] sm:$0xff]
    %v57 = vld [vmem:[#allocation6 + $0x48] sm:$0xff]
    %v58 = vld [vmem:[#allocation6 + $0x50] sm:$0xff]
    %v59 = vld [vmem:[#allocation6 + $0x58] sm:$0xff]
    %v60 = vld [vmem:[#allocation6 + $0x60] sm:$0xff]
    %v61 = vld [vmem:[#allocation6 + $0x68] sm:$0xff]
    %v62 = vld [vmem:[#allocation6 + $0x70] sm:$0xff]
    %v63 = vld [vmem:[#allocation6 + $0x78] sm:$0xff]
    %v64 = vmul.f32 %v48, 0.088388346
    %v65 = vmul.f32 %v49, 0.088388346
    %v66 = vmul.f32 %v50, 0.088388346
    %v67 = vmul.f32 %v51, 0.088388346
    %v68 = vmul.f32 %v52, 0.088388346
    %v69 = vmul.f32 %v53, 0.088388346
    %v70 = vmul.f32 %v54, 0.088388346
    %v71 = vmul.f32 %v55, 0.088388346
    %v72 = vmul.f32 %v56, 0.088388346
    %v73 = vmul.f32 %v57, 0.088388346
    %v74 = vmul.f32 %v58, 0.088388346
    %v75 = vmul.f32 %v59, 0.088388346
    %v76 = vmul.f32 %v60, 0.088388346
    %v77 = vmul.f32 %v61, 0.088388346
    %v78 = vmul.f32 %v62, 0.088388346
    %v79 = vmul.f32 %v63, 0.088388346
    %80 = vmatprep.subr.mxu0 0.0
    %81 = vmatpush1.msra.mxu0 %v64
    %82 = vmatprep.subr.mxu0 0.0
    %83 = vmatpush1.msra.mxu0 %v65
    %84 = vmatprep.subr.mxu0 0.0
    %85 = vmatpush1.msra.mxu0 %v66
    %86 = vmatprep.subr.mxu0 0.0
    %87 = vmatpush1.msra.mxu0 %v67
    %88 = vmatprep.subr.mxu0 0.0
    %89 = vmatpush1.msra.mxu0 %v68
    %90 = vmatprep.subr.mxu0 0.0
    %91 = vmatpush1.msra.mxu0 %v69
    %92 = vmatprep.subr.mxu0 0.0
    %93 = vmatpush1.msra.mxu0 %v70
    %94 = vmatprep.subr.mxu0 0.0
    %95 = vmatpush1.msra.mxu0 %v71
    %96 = vmatprep.subr.mxu0 0.0
    %97 = vmatpush1.msra.mxu0 %v72
    %98 = vmatprep.subr.mxu0 0.0
    %99 = vmatpush1.msra.mxu0 %v73
    %100 = vmatprep.subr.mxu0 0.0
    %101 = vmatpush1.msra.mxu0 %v74
    %102 = vmatprep.subr.mxu0 0.0
    %103 = vmatpush1.msra.mxu0 %v75
    %104 = vmatprep.subr.mxu0 0.0
    %105 = vmatpush1.msra.mxu0 %v76
    %106 = vmatprep.subr.mxu0 0.0
    %107 = vmatpush1.msra.mxu0 %v77
    %108 = vmatprep.subr.mxu0 0.0
    %109 = vmatpush1.msra.mxu0 %v78
    %110 = vmatprep.subr.mxu0 0.0
    %111 = vmatpush1.msra.mxu0 %v79
    %112 = vmatprep.subr.mxu0 0.0
    %113 = vmatpush1.msra.mxu0 0.0
    %114 = vmatprep.subr.mxu0 0.0
    %115 = vmatpush1.msra.mxu0 0.0
    %116 = vmatprep.subr.mxu0 0.0
    %117 = vmatpush1.msra.mxu0 0.0
    %118 = vmatprep.subr.mxu0 0.0
    %119 = vmatpush1.msra.mxu0 0.0
    %120 = vmatprep.subr.mxu0 0.0
    %121 = vmatpush1.msra.mxu0 0.0
    %122 = vmatprep.subr.mxu0 0.0
    %123 = vmatpush1.msra.mxu0 0.0
    %124 = vmatprep.subr.mxu0 0.0
    %125 = vmatpush1.msra.mxu0 0.0
    %126 = vmatprep.subr.mxu0 0.0
    %127 = vmatpush1.msra.mxu0 0.0
    %128 = vmatprep.subr.mxu0 0.0
    %129 = vmatpush1.msra.mxu0 0.0
    %130 = vmatprep.subr.mxu0 0.0
    %131 = vmatpush1.msra.mxu0 0.0
    %132 = vmatprep.subr.mxu0 0.0
    %133 = vmatpush1.msra.mxu0 0.0
    %134 = vmatprep.subr.mxu0 0.0
    %135 = vmatpush1.msra.mxu0 0.0
    %136 = vmatprep.subr.mxu0 0.0
    %137 = vmatpush1.msra.mxu0 0.0
    %138 = vmatprep.subr.mxu0 0.0
    %139 = vmatpush1.msra.mxu0 0.0
    %140 = vmatprep.subr.mxu0 0.0
    %141 = vmatpush1.msra.mxu0 0.0
    %142 = vmatprep.subr.mxu0 0.0
    %143 = vmatpush1.msra.mxu0 0.0
    %144 = vmatprep.mubr.f32.mxu0 0.0
    %145 = vmatmul.mubr.f32.gmra.mrb[0].mxu0 %v47
    %v146 = vpop.f32.mrb[0].mxu0
    %v147 = vadd.f32 0.0, %v146
    %v148 = vpop.f32.mrb[0].mxu0
    %149 = vdwg.mxu0
    %v150 = vadd.f32 %v46, %v147
    %151 = vst [vmem:[#allocation2] sm:$0xff] %v150
    // Predicated region
    $region26: #{tpu_custom_call.1} parent=1 // pred_check
      %p152 = pneg %p41
    $region27: #{tpu_custom_call.1} parent=1 // pred_check_branch
      %154 = sbr.rel (%p152) target = $region29
    $region28: #{tpu_custom_call.1} parent=1 // pred_region
      %v155 = vld [vmem:[#allocation2] sm:$0xff]
      %v156 = vld [vmem:[%s2] sm:$0x1]
      %v157 = vmul.f32 %v156, 0.5
      %v159 = vlaneseq
      %v160 = vshrl.u32 %v159, 7
      %v161 = vsub.s32 0, %v160
      %v162 = vrot.slane %v157, %v161
      %v164 = vadd.f32 %v155, %v162
      %165 = vst [vmem:[#allocation8] sm:$0xff] %v164
    $region29: #{tpu_custom_call.1} parent=1 // pred_fallthru
      _
    // Predicated region
    $region30: #{tpu_custom_call.1} parent=1 // pred_check
      _
    $region31: #{tpu_custom_call.1} parent=1 // pred_check_branch
      %167 = sbr.rel (0) target = $region33
    $region32: #{tpu_custom_call.1} parent=1 // pred_region
      %s169 = ssub.s32 128, 128
      %170 = vsyncadd [#allocation5], %s169
      %s172 = sshll.u32 [#allocation8], 4
      %s173 = int_to_ptr.vmem [resolvable:$true] %s172
      %175 = dma.vmem_to_hbm [thread:$0]  %s173, 128, %s3, [#allocation5]
    $region33: #{tpu_custom_call.1} parent=1 // pred_fallthru
      _
    // Predicated region
    $region34: #{tpu_custom_call.1} parent=1 // pred_check
      _
    $region35: #{tpu_custom_call.1} parent=1 // pred_check_branch
      %177 = sbr.rel (0) target = $region37
    $region36: #{tpu_custom_call.1} parent=1 // pred_region
      %178 = dma.done [#allocation5], 128
    $region37: #{tpu_custom_call.1} parent=1 // pred_fallthru
      _
    %179 = vsyncpa [#allocation4], 1
    %180 = vsyncpa [#allocation7], 1
    %181 = vsyncpa [#allocation5], 1

</llo_original>
